<compile_context>
chip_gen: v6e
topology: v6e:2x2x1
jax: 0.10.0
libtpu: 0.0.40
codegen_flags: <defaults>
</compile_context>

<pallas_src>
import re
import numpy as np
import jax
import jax.numpy as jnp
from jax import lax
from jax.experimental import pallas as pl
from jax.experimental.pallas import tpu as pltpu

GAMMA = 2.0  # ComplexLoss(gamma=2)
FACTORS = {
    0: ['hazy', 'blurry', 'clear'],
    1: ['extreme brightness', 'normal brightness'],
    2: ['uniform stain', 'uneven stain'],
    3: ['purple', 'red', 'blue-purple'],
    4: ['small', 'medium', 'large'],
}
COUNTS = [3, 2, 2, 3, 3]
OFFSETS = [0, 3, 5, 7, 10]           # start of each factor's class block (13 lanes used)
LANES = 128                           # pad class axis to one full lane vector
SIM_SHAPE = (1, 3, 2, 2, 3, 3)        # (b, blur, brightness, stain, color, size)
NFLAT = int(np.prod(SIM_SHAPE))       # 108
NEG = -1e30

SENTENCE_FORMAT = ('A {bl} WSI with {br}, {st}, a {c} coloring style, '
                   'and showing {si}-sized tumor, is {adj} to classify')
PATTERN = '^' + re.sub('\\{.*?\\}', '(.+)', SENTENCE_FORMAT) + '$'


def parse_targets(targets):
    """Host-side regex parsing of target strings -> (S, 5) int32 class indices."""
    # TODO(synk): regex string parsing has no Pallas equivalent; stays on host.
    idx = np.zeros((len(targets), 5), np.int32)
    for s, t in enumerate(targets):
        vals = re.match(PATTERN, t).groups()
        for f in range(5):
            idx[s, f] = FACTORS[f].index(vals[f])
    return idx


def _build_constants():
    """Precomputed constant matrices (built once at import)."""
    # A: (108,128) flat-element -> factor-class marginal sums (5 factor blocks in lanes 0..12)
    A = np.zeros((NFLAT, LANES), np.float32)
    grid6 = np.indices(SIM_SHAPE).reshape(len(SIM_SHAPE), -1)   # (6, 108)
    for pos in range(NFLAT):
        for f in range(5):
            A[pos, OFFSETS[f] + grid6[f + 1, pos]] += 1.0
    fid = np.full((LANES,), -1, np.int64)
    for f in range(5):
        fid[OFFSETS[f]:OFFSETS[f] + COUNTS[f]] = f
    # SEG: (128,128) 0/1 segment-sum matrix: lane l contributes to column fid[l].
    SEG = np.zeros((LANES, LANES), np.float32)
    for l in range(LANES):
        if fid[l] >= 0:
            SEG[l, fid[l]] = 1.0
    # MAXBIAS row f: 0 on factor-f lanes, -1e30 elsewhere (additive mask for the max).
    # FMASK   row f: 1 on factor-f lanes, 0 elsewhere (broadcast the factor max back).
    MAXBIAS = np.full((8, LANES), NEG, np.float32)
    FMASK = np.zeros((8, LANES), np.float32)
    for f in range(5):
        MAXBIAS[f, OFFSETS[f]:OFFSETS[f] + COUNTS[f]] = 0.0
        FMASK[f, OFFSETS[f]:OFFSETS[f] + COUNTS[f]] = 1.0
    # MISC rows 0..4: unit vector e_f (1 at lane f)  -> pack per-factor maxes into lanes 0..4
    #      row 5    : pad bias (0 on the 13 valid lanes, -1e30 on padding lanes)
    #      row 6    : +1 guard on lanes >= 5 so log() of unused denominator lanes is 0
    MISC = np.zeros((8, LANES), np.float32)
    for f in range(5):
        MISC[f, f] = 1.0
    MISC[5] = np.where(fid >= 0, 0.0, NEG)
    MISC[6] = np.where(np.arange(LANES) < 5, 0.0, 1.0)
    return A, SEG, MAXBIAS, FMASK, MISC


_HOST_CONSTS = _build_constants()
_DEV_CONSTS = None


def _device_constants():
    global _DEV_CONSTS
    if _DEV_CONSTS is None:
        _DEV_CONSTS = tuple(jnp.asarray(c) for c in _HOST_CONSTS)
    return _DEV_CONSTS


def _round_up(x, m):
    return (x + m - 1) // m * m


def complex_loss_kernel(n_ref, ts_ref, tgt_ref, agg_ref, seg_ref,
                        maxbias_ref, fmask_ref, misc_ref, out_ref):
    # n_ref      : SMEM (1,) i32  -- true sample count S (scalar prefetch)
    # ts_ref     : (TS, 108) f32  -- flattened similarity tensors (tile over samples)
    # tgt_ref    : (TS, 128) i8   -- one-hot targets (5 ones per valid row)
    # agg_ref    : (108, 128) f32 -- marginal-sum aggregation matrix (resident)
    # seg_ref    : (128, 128) f32 -- lane -> factor segment-sum matrix (resident)
    # maxbias_ref: (8, 128) f32   -- per-factor additive max masks (resident)
    # fmask_ref  : (8, 128) f32   -- per-factor lane masks (resident)
    # misc_ref   : (8, 128) f32   -- e_f rows / pad bias / log guard (resident)
    # out_ref    : (1, 128) f32   -- resident accumulator (sum of focal terms)
    tile_rows = ts_ref.shape[0]
    step = pl.program_id(0)

    @pl.when(step == 0)
    def _():
        out_ref[...] = jnp.zeros_like(out_ref)

    # All 5 factor-marginal logit sets in one MXU matmul: (TS,108) @ (108,128).
    logits = jnp.dot(ts_ref[...], agg_ref[...], preferred_element_type=jnp.float32)

    mb = maxbias_ref[...]
    fm = fmask_ref[...]
    misc = misc_ref[...]

    # Per-factor maxes: the only per-factor XLU reductions kept.
    m_packed = jnp.zeros_like(logits)    # m_f placed at lane f (for the lse)
    lane_max = jnp.zeros_like(logits)    # m_f broadcast onto factor-f lanes (for the exp)
    for f in range(5):                   # unrolled, 5 factors
        m_f = jnp.max(logits + mb[f:f + 1, :], axis=-1, keepdims=True)   # (TS,1)
        m_packed = m_packed + m_f * misc[f:f + 1, :]
        lane_max = lane_max + m_f * fm[f:f + 1, :]

    # Single exp pass; padding lanes are driven to exp(-inf)=0 by misc row 5.
    e = jnp.exp(logits - lane_max + misc[5:6, :])

    # Segment sums on the MXU: denominators and target logits land in lanes 0..4.
    denom = jnp.dot(e, seg_ref[...], preferred_element_type=jnp.float32)
    tgt_onehot = tgt_ref[...].astype(jnp.float32)
    tgt_logit = jnp.dot(tgt_onehot * logits, seg_ref[...],
                        preferred_element_type=jnp.float32)

    # Cross entropy + focal weighting; lanes >= 5 come out exactly 0.
    logp = m_packed + jnp.log(denom + misc[6:7, :]) - tgt_logit
    p = jnp.exp(-logp)
    q = 1.0 - p
    focal = q * q * logp                 # (1 - p) ** gamma with gamma = 2, no pow

    # Mask rows past the true sample count (padded tail of the last tile).
    row_ids = lax.broadcasted_iota(jnp.int32, (tile_rows, 1), 0) + step * tile_rows
    row_valid = (row_ids < n_ref[0]).astype(jnp.float32)

    out_ref[...] += jnp.sum(focal * row_valid, axis=0, keepdims=True)


def complex_loss(text_similarities, targets):
    S = text_similarities.shape[0]
    assert tuple(text_similarities.shape[1:]) == SIM_SHAPE
    tidx = parse_targets(targets)                       # host-side (regex)

    TS = min(1024, _round_up(S, 8))                     # tile over samples
    S_pad = _round_up(S, TS)
    num_tiles = S_pad // TS

    ts_flat = jnp.asarray(text_similarities, jnp.float32).reshape(S, NFLAT)
    if S_pad > S:
        ts_flat = jnp.pad(ts_flat, ((0, S_pad - S), (0, 0)))

    # int8 one-hot targets (vectorized construction): 4x fewer HBM bytes than f32.
    tgt_np = np.zeros((S_pad, LANES), np.int8)
    rows = np.repeat(np.arange(S), 5)
    cols = (np.asarray(OFFSETS, np.int64)[None, :] + tidx.astype(np.int64)).reshape(-1)
    tgt_np[rows, cols] = 1

    agg, seg, maxbias, fmask, misc = _device_constants()
    n_samples = jnp.asarray([S], jnp.int32)

    # TODO(synk): on v7x the single resident accumulator serializes the grid on one
    # TensorCore; per-tile partial-sum outputs + "parallel" semantics would use both.
    partial = pl.pallas_call(
        complex_loss_kernel,
        out_shape=jax.ShapeDtypeStruct((1, LANES), jnp.float32),
        grid_spec=pltpu.PrefetchScalarGridSpec(
            num_scalar_prefetch=1,
            grid=(num_tiles,),
            in_specs=[
                pl.BlockSpec((TS, NFLAT), lambda i, n: (i, 0)),   # similarity rows
                pl.BlockSpec((TS, LANES), lambda i, n: (i, 0)),   # int8 one-hot targets
                pl.BlockSpec((NFLAT, LANES), lambda i, n: (0, 0)),  # aggregation (resident)
                pl.BlockSpec((LANES, LANES), lambda i, n: (0, 0)),  # segment-sum (resident)
                pl.BlockSpec((8, LANES), lambda i, n: (0, 0)),      # max biases (resident)
                pl.BlockSpec((8, LANES), lambda i, n: (0, 0)),      # factor masks (resident)
                pl.BlockSpec((8, LANES), lambda i, n: (0, 0)),      # misc rows (resident)
            ],
            out_specs=pl.BlockSpec((1, LANES), lambda i, n: (0, 0)),
        ),
        compiler_params=pltpu.CompilerParams(
            dimension_semantics=("arbitrary",),
            vmem_limit_bytes=32 * 1024 * 1024,
        ),
    )(n_samples, ts_flat, jnp.asarray(tgt_np), agg, seg, maxbias, fmask, misc)

    return jnp.sum(partial) / (5.0 * S)


def reference_loss(ts, targets):
    """Pure numpy reference mirroring the PyTorch forward."""
    tidx = parse_targets(targets)
    sum_axes = {0: (2, 3, 4, 5), 1: (1, 3, 4, 5), 2: (1, 2, 4, 5),
                3: (1, 2, 3, 5), 4: (1, 2, 3, 4)}
    losses = []
    for s in range(ts.shape[0]):
        x = np.asarray(ts[s], np.float64)                      # (1,3,2,2,3,3)
        per = []
        for f in range(5):
            z = x.sum(axis=sum_axes[f])[0]                     # (C,)
            lse = np.log(np.sum(np.exp(z - z.max()))) + z.max()
            logp = lse - z[tidx[s, f]]                         # CE (batch of 1)
            p = np.exp(-logp)
            per.append((1.0 - p) ** GAMMA * logp)
        losses.append(sum(per) / 5.0)
    # TODO(synk): original code calls .mean() on a Python list (a bug); we take
    # the intended mean over samples.
    return float(np.mean(losses))


if __name__ == "__main__":
    key = jax.random.PRNGKey(0)
    S = 2
    ts = jax.random.normal(key, (S,) + SIM_SHAPE, dtype=jnp.float32)
    targets = [
        SENTENCE_FORMAT.format(bl='hazy', br='extreme brightness',
                               st='uniform stain', c='purple',
                               si='small', adj='hard'),
        SENTENCE_FORMAT.format(bl='clear', br='normal brightness',
                               st='uneven stain', c='blue-purple',
                               si='large', adj='easy'),
    ]
    out = complex_loss(ts, targets)
    out = jax.block_until_ready(out)
    ref = reference_loss(np.asarray(ts), targets)
    assert np.allclose(float(out), ref, rtol=1e-4, atol=1e-5), (float(out), ref)
    print("KERNEL_OK")
</pallas_src>

<mosaic_0001>
module attributes {stable_mosaic.version = 11 : i64} {
  func.func @complex_loss_kernel(%arg0: i32, %arg1: memref<1xi32, #tpu.memory_space<smem>>, %arg2: memref<8x108xf32, #tpu.memory_space<vmem>>, %arg3: memref<8x128xi8, #tpu.memory_space<vmem>>, %arg4: memref<108x128xf32, #tpu.memory_space<vmem>>, %arg5: memref<128x128xf32, #tpu.memory_space<vmem>>, %arg6: memref<8x128xf32, #tpu.memory_space<vmem>>, %arg7: memref<8x128xf32, #tpu.memory_space<vmem>>, %arg8: memref<8x128xf32, #tpu.memory_space<vmem>>, %arg9: memref<1x128xf32, #tpu.memory_space<vmem>>) attributes {dimension_semantics = [#tpu.dimension_semantics<arbitrary>], iteration_bounds = array<i64: 1>, scalar_prefetch = 1 : i64, scratch_operands = 0 : i64, tpu.core_type = #tpu.core_type<tc>, window_params = [{transform_indices = @transform_0, window_bounds = array<i64: 8, 108>}, {transform_indices = @transform_1, window_bounds = array<i64: 8, 128>}, {pipeline_mode = #tpu.pipeline_mode<synchronous>, transform_indices = @transform_2, window_bounds = array<i64: 108, 128>}, {pipeline_mode = #tpu.pipeline_mode<synchronous>, transform_indices = @transform_3, window_bounds = array<i64: 128, 128>}, {pipeline_mode = #tpu.pipeline_mode<synchronous>, transform_indices = @transform_4, window_bounds = array<i64: 8, 128>}, {pipeline_mode = #tpu.pipeline_mode<synchronous>, transform_indices = @transform_5, window_bounds = array<i64: 8, 128>}, {pipeline_mode = #tpu.pipeline_mode<synchronous>, transform_indices = @transform_6, window_bounds = array<i64: 8, 128>}, {pipeline_mode = #tpu.pipeline_mode<synchronous>, transform_indices = @transform_7, window_bounds = array<i64: 1, 128>}]} {
    %c0_i32 = arith.constant 0 : i32
    %0 = arith.cmpi eq, %arg0, %c0_i32 : i32
    %1 = arith.extui %0 : i1 to i32
    %c0_i32_0 = arith.constant 0 : i32
    %2 = arith.cmpi ne, %1, %c0_i32_0 : i32
    scf.if %2 {
      %cst_33 = arith.constant 0.000000e+00 : f32
      %127 = vector.broadcast %cst_33 : f32 to vector<1x128xf32>
      %c0_34 = arith.constant 0 : index
      %c0_35 = arith.constant 0 : index
      %128 = vector.load %arg9[%c0_34, %c0_35] : memref<1x128xf32, #tpu.memory_space<vmem>>, vector<1x128xf32>
      tpu.vector_store %arg9[%c0_34, %c0_35], %127 {strides = array<i32>} : memref<1x128xf32, #tpu.memory_space<vmem>>, vector<1x128xf32>,
    } else {
    }
    %c0 = arith.constant 0 : index
    %c0_1 = arith.constant 0 : index
    %3 = vector.load %arg2[%c0, %c0_1] : memref<8x108xf32, #tpu.memory_space<vmem>>, vector<8x108xf32>
    %c0_2 = arith.constant 0 : index
    %c0_3 = arith.constant 0 : index
    %4 = vector.load %arg4[%c0_2, %c0_3] : memref<108x128xf32, #tpu.memory_space<vmem>>, vector<108x128xf32>
    %cst = arith.constant dense<0.000000e+00> : vector<8x128xf32>
    %5 = tpu.matmul %3, %4, %cst {dimension_numbers = #tpu.dot_dimension_numbers<[1], [0], [0], [1], [0, 0, 1, 1], [], []>} : vector<8x108xf32>, vector<108x128xf32>, vector<8x128xf32> -> vector<8x128xf32>
    %c0_4 = arith.constant 0 : index
    %c0_5 = arith.constant 0 : index
    %6 = vector.load %arg6[%c0_4, %c0_5] : memref<8x128xf32, #tpu.memory_space<vmem>>, vector<8x128xf32>
    %c0_6 = arith.constant 0 : index
    %c0_7 = arith.constant 0 : index
    %7 = vector.load %arg7[%c0_6, %c0_7] : memref<8x128xf32, #tpu.memory_space<vmem>>, vector<8x128xf32>
    %c0_8 = arith.constant 0 : index
    %c0_9 = arith.constant 0 : index
    %8 = vector.load %arg8[%c0_8, %c0_9] : memref<8x128xf32, #tpu.memory_space<vmem>>, vector<8x128xf32>
    %cst_10 = arith.constant 0.000000e+00 : f32
    %9 = vector.broadcast %cst_10 : f32 to vector<8x128xf32>
    %cst_11 = arith.constant 0.000000e+00 : f32
    %10 = vector.broadcast %cst_11 : f32 to vector<8x128xf32>
    %11 = vector.extract_strided_slice %6 {offsets = [0, 0], sizes = [1, 128], strides = [1, 1]} : vector<8x128xf32> to vector<1x128xf32>
    %12 = vector.broadcast %11 : vector<1x128xf32> to vector<8x128xf32>
    %13 = arith.addf %5, %12 : vector<8x128xf32>
    %cst_12 = arith.constant dense<0xFF800000> : vector<8xf32>
    %14 = vector.multi_reduction <maximumf>, %13, %cst_12 [1] : vector<8x128xf32> to vector<8xf32>
    %15 = vector.shape_cast %14 : vector<8xf32> to vector<8x1xf32>
    %16 = vector.extract_strided_slice %8 {offsets = [0, 0], sizes = [1, 128], strides = [1, 1]} : vector<8x128xf32> to vector<1x128xf32>
    %17 = vector.broadcast %15 : vector<8x1xf32> to vector<8x128xf32>
    %18 = vector.broadcast %16 : vector<1x128xf32> to vector<8x128xf32>
    %19 = arith.mulf %17, %18 : vector<8x128xf32>
    %20 = arith.addf %9, %19 : vector<8x128xf32>
    %21 = vector.extract_strided_slice %7 {offsets = [0, 0], sizes = [1, 128], strides = [1, 1]} : vector<8x128xf32> to vector<1x128xf32>
    %22 = vector.broadcast %15 : vector<8x1xf32> to vector<8x128xf32>
    %23 = vector.broadcast %21 : vector<1x128xf32> to vector<8x128xf32>
    %24 = arith.mulf %22, %23 : vector<8x128xf32>
    %25 = arith.addf %10, %24 : vector<8x128xf32>
    %26 = vector.extract_strided_slice %6 {offsets = [1, 0], sizes = [1, 128], strides = [1, 1]} : vector<8x128xf32> to vector<1x128xf32>
    %27 = vector.broadcast %26 : vector<1x128xf32> to vector<8x128xf32>
    %28 = arith.addf %5, %27 : vector<8x128xf32>
    %cst_13 = arith.constant dense<0xFF800000> : vector<8xf32>
    %29 = vector.multi_reduction <maximumf>, %28, %cst_13 [1] : vector<8x128xf32> to vector<8xf32>
    %30 = vector.shape_cast %29 : vector<8xf32> to vector<8x1xf32>
    %31 = vector.extract_strided_slice %8 {offsets = [1, 0], sizes = [1, 128], strides = [1, 1]} : vector<8x128xf32> to vector<1x128xf32>
    %32 = vector.broadcast %30 : vector<8x1xf32> to vector<8x128xf32>
    %33 = vector.broadcast %31 : vector<1x128xf32> to vector<8x128xf32>
    %34 = arith.mulf %32, %33 : vector<8x128xf32>
    %35 = arith.addf %20, %34 : vector<8x128xf32>
    %36 = vector.extract_strided_slice %7 {offsets = [1, 0], sizes = [1, 128], strides = [1, 1]} : vector<8x128xf32> to vector<1x128xf32>
    %37 = vector.broadcast %30 : vector<8x1xf32> to vector<8x128xf32>
    %38 = vector.broadcast %36 : vector<1x128xf32> to vector<8x128xf32>
    %39 = arith.mulf %37, %38 : vector<8x128xf32>
    %40 = arith.addf %25, %39 : vector<8x128xf32>
    %41 = vector.extract_strided_slice %6 {offsets = [2, 0], sizes = [1, 128], strides = [1, 1]} : vector<8x128xf32> to vector<1x128xf32>
    %42 = vector.broadcast %41 : vector<1x128xf32> to vector<8x128xf32>
    %43 = arith.addf %5, %42 : vector<8x128xf32>
    %cst_14 = arith.constant dense<0xFF800000> : vector<8xf32>
    %44 = vector.multi_reduction <maximumf>, %43, %cst_14 [1] : vector<8x128xf32> to vector<8xf32>
    %45 = vector.shape_cast %44 : vector<8xf32> to vector<8x1xf32>
    %46 = vector.extract_strided_slice %8 {offsets = [2, 0], sizes = [1, 128], strides = [1, 1]} : vector<8x128xf32> to vector<1x128xf32>
    %47 = vector.broadcast %45 : vector<8x1xf32> to vector<8x128xf32>
    %48 = vector.broadcast %46 : vector<1x128xf32> to vector<8x128xf32>
    %49 = arith.mulf %47, %48 : vector<8x128xf32>
    %50 = arith.addf %35, %49 : vector<8x128xf32>
    %51 = vector.extract_strided_slice %7 {offsets = [2, 0], sizes = [1, 128], strides = [1, 1]} : vector<8x128xf32> to vector<1x128xf32>
    %52 = vector.broadcast %45 : vector<8x1xf32> to vector<8x128xf32>
    %53 = vector.broadcast %51 : vector<1x128xf32> to vector<8x128xf32>
    %54 = arith.mulf %52, %53 : vector<8x128xf32>
    %55 = arith.addf %40, %54 : vector<8x128xf32>
    %56 = vector.extract_strided_slice %6 {offsets = [3, 0], sizes = [1, 128], strides = [1, 1]} : vector<8x128xf32> to vector<1x128xf32>
    %57 = vector.broadcast %56 : vector<1x128xf32> to vector<8x128xf32>
    %58 = arith.addf %5, %57 : vector<8x128xf32>
    %cst_15 = arith.constant dense<0xFF800000> : vector<8xf32>
    %59 = vector.multi_reduction <maximumf>, %58, %cst_15 [1] : vector<8x128xf32> to vector<8xf32>
    %60 = vector.shape_cast %59 : vector<8xf32> to vector<8x1xf32>
    %61 = vector.extract_strided_slice %8 {offsets = [3, 0], sizes = [1, 128], strides = [1, 1]} : vector<8x128xf32> to vector<1x128xf32>
    %62 = vector.broadcast %60 : vector<8x1xf32> to vector<8x128xf32>
    %63 = vector.broadcast %61 : vector<1x128xf32> to vector<8x128xf32>
    %64 = arith.mulf %62, %63 : vector<8x128xf32>
    %65 = arith.addf %50, %64 : vector<8x128xf32>
    %66 = vector.extract_strided_slice %7 {offsets = [3, 0], sizes = [1, 128], strides = [1, 1]} : vector<8x128xf32> to vector<1x128xf32>
    %67 = vector.broadcast %60 : vector<8x1xf32> to vector<8x128xf32>
    %68 = vector.broadcast %66 : vector<1x128xf32> to vector<8x128xf32>
    %69 = arith.mulf %67, %68 : vector<8x128xf32>
    %70 = arith.addf %55, %69 : vector<8x128xf32>
    %71 = vector.extract_strided_slice %6 {offsets = [4, 0], sizes = [1, 128], strides = [1, 1]} : vector<8x128xf32> to vector<1x128xf32>
    %72 = vector.broadcast %71 : vector<1x128xf32> to vector<8x128xf32>
    %73 = arith.addf %5, %72 : vector<8x128xf32>
    %cst_16 = arith.constant dense<0xFF800000> : vector<8xf32>
    %74 = vector.multi_reduction <maximumf>, %73, %cst_16 [1] : vector<8x128xf32> to vector<8xf32>
    %75 = vector.shape_cast %74 : vector<8xf32> to vector<8x1xf32>
    %76 = vector.extract_strided_slice %8 {offsets = [4, 0], sizes = [1, 128], strides = [1, 1]} : vector<8x128xf32> to vector<1x128xf32>
    %77 = vector.broadcast %75 : vector<8x1xf32> to vector<8x128xf32>
    %78 = vector.broadcast %76 : vector<1x128xf32> to vector<8x128xf32>
    %79 = arith.mulf %77, %78 : vector<8x128xf32>
    %80 = arith.addf %65, %79 : vector<8x128xf32>
    %81 = vector.extract_strided_slice %7 {offsets = [4, 0], sizes = [1, 128], strides = [1, 1]} : vector<8x128xf32> to vector<1x128xf32>
    %82 = vector.broadcast %75 : vector<8x1xf32> to vector<8x128xf32>
    %83 = vector.broadcast %81 : vector<1x128xf32> to vector<8x128xf32>
    %84 = arith.mulf %82, %83 : vector<8x128xf32>
    %85 = arith.addf %70, %84 : vector<8x128xf32>
    %86 = arith.subf %5, %85 : vector<8x128xf32>
    %87 = vector.extract_strided_slice %8 {offsets = [5, 0], sizes = [1, 128], strides = [1, 1]} : vector<8x128xf32> to vector<1x128xf32>
    %88 = vector.broadcast %87 : vector<1x128xf32> to vector<8x128xf32>
    %89 = arith.addf %86, %88 : vector<8x128xf32>
    %90 = math.exp %89 : vector<8x128xf32>
    %c0_17 = arith.constant 0 : index
    %c0_18 = arith.constant 0 : index
    %91 = vector.load %arg5[%c0_17, %c0_18] : memref<128x128xf32, #tpu.memory_space<vmem>>, vector<128x128xf32>
    %cst_19 = arith.constant dense<0.000000e+00> : vector<8x128xf32>
    %92 = tpu.matmul %90, %91, %cst_19 {dimension_numbers = #tpu.dot_dimension_numbers<[1], [0], [0], [1], [0, 0, 1, 1], [], []>} : vector<8x128xf32>, vector<128x128xf32>, vector<8x128xf32> -> vector<8x128xf32>
    %c0_20 = arith.constant 0 : index
    %c0_21 = arith.constant 0 : index
    %93 = vector.load %arg3[%c0_20, %c0_21] : memref<8x128xi8, #tpu.memory_space<vmem>>, vector<8x128xi8>
    %94 = arith.sitofp %93 : vector<8x128xi8> to vector<8x128xf32>
    %95 = arith.mulf %94, %5 : vector<8x128xf32>
    %c0_22 = arith.constant 0 : index
    %c0_23 = arith.constant 0 : index
    %96 = vector.load %arg5[%c0_22, %c0_23] : memref<128x128xf32, #tpu.memory_space<vmem>>, vector<128x128xf32>
    %cst_24 = arith.constant dense<0.000000e+00> : vector<8x128xf32>
    %97 = tpu.matmul %95, %96, %cst_24 {dimension_numbers = #tpu.dot_dimension_numbers<[1], [0], [0], [1], [0, 0, 1, 1], [], []>} : vector<8x128xf32>, vector<128x128xf32>, vector<8x128xf32> -> vector<8x128xf32>
    %98 = vector.extract_strided_slice %8 {offsets = [6, 0], sizes = [1, 128], strides = [1, 1]} : vector<8x128xf32> to vector<1x128xf32>
    %99 = vector.broadcast %98 : vector<1x128xf32> to vector<8x128xf32>
    %100 = arith.addf %92, %99 : vector<8x128xf32>
    %101 = math.log %100 : vector<8x128xf32>
    %102 = arith.addf %80, %101 : vector<8x128xf32>
    %103 = arith.subf %102, %97 : vector<8x128xf32>
    %cst_25 = arith.constant 0.000000e+00 : f32
    %104 = vector.broadcast %cst_25 : f32 to vector<8x128xf32>
    %105 = arith.subf %104, %103 : vector<8x128xf32>
    %106 = math.exp %105 : vector<8x128xf32>
    %cst_26 = arith.constant 1.000000e+00 : f32
    %107 = vector.broadcast %cst_26 : f32 to vector<8x128xf32>
    %108 = arith.subf %107, %106 : vector<8x128xf32>
    %109 = arith.mulf %108, %108 : vector<8x128xf32>
    %110 = arith.mulf %109, %103 : vector<8x128xf32>
    %111 = tpu.iota {dimensions = array<i32: 0>} : vector<8x1xi32>
    %c8_i32 = arith.constant 8 : i32
    %112 = arith.muli %arg0, %c8_i32 : i32
    %113 = vector.broadcast %112 : i32 to vector<8x1xi32>
    %114 = arith.addi %111, %113 : vector<8x1xi32>
    %c0_27 = arith.constant 0 : index
    %115 = memref.load %arg1[%c0_27] : memref<1xi32, #tpu.memory_space<smem>>
    %116 = vector.broadcast %115 : i32 to vector<8x1xi32>
    %117 = arith.cmpi slt, %114, %116 : vector<8x1xi32>
    %118 = arith.extui %117 : vector<8x1xi1> to vector<8x1xi32>
    %119 = arith.sitofp %118 : vector<8x1xi32> to vector<8x1xf32>
    %c0_28 = arith.constant 0 : index
    %c0_29 = arith.constant 0 : index
    %120 = vector.load %arg9[%c0_28, %c0_29] : memref<1x128xf32, #tpu.memory_space<vmem>>, vector<1x128xf32>
    %121 = vector.broadcast %119 : vector<8x1xf32> to vector<8x128xf32>
    %122 = arith.mulf %110, %121 : vector<8x128xf32>
    %cst_30 = arith.constant dense<0.000000e+00> : vector<128xf32>
    %123 = vector.multi_reduction <add>, %122, %cst_30 [0] : vector<8x128xf32> to vector<128xf32>
    %124 = vector.shape_cast %123 : vector<128xf32> to vector<1x128xf32>
    %125 = arith.addf %120, %124 : vector<1x128xf32>
    %c0_31 = arith.constant 0 : index
    %c0_32 = arith.constant 0 : index
    %126 = vector.load %arg9[%c0_31, %c0_32] : memref<1x128xf32, #tpu.memory_space<vmem>>, vector<1x128xf32>
    tpu.vector_store %arg9[%c0_31, %c0_32], %125 {strides = array<i32>} : memref<1x128xf32, #tpu.memory_space<vmem>>, vector<1x128xf32>,
    return
  }
  func.func @transform_0(%arg0: i32, %arg1: memref<1xi32, #tpu.memory_space<smem>>) -> (i32, i32) {
    %c0_i32 = arith.constant 0 : i32
    %c0_i32_0 = arith.constant 0 : i32
    return %arg0, %c0_i32 : i32, i32
  }
  func.func @transform_1(%arg0: i32, %arg1: memref<1xi32, #tpu.memory_space<smem>>) -> (i32, i32) {
    %c0_i32 = arith.constant 0 : i32
    %c0_i32_0 = arith.constant 0 : i32
    return %arg0, %c0_i32 : i32, i32
  }
  func.func @transform_2(%arg0: i32, %arg1: memref<1xi32, #tpu.memory_space<smem>>) -> (i32, i32) {
    %c0_i32 = arith.constant 0 : i32
    %c0_i32_0 = arith.constant 0 : i32
    %c0_i32_1 = arith.constant 0 : i32
    return %c0_i32, %c0_i32_0 : i32, i32
  }
  func.func @transform_3(%arg0: i32, %arg1: memref<1xi32, #tpu.memory_space<smem>>) -> (i32, i32) {
    %c0_i32 = arith.constant 0 : i32
    %c0_i32_0 = arith.constant 0 : i32
    %c0_i32_1 = arith.constant 0 : i32
    return %c0_i32, %c0_i32_0 : i32, i32
  }
  func.func @transform_4(%arg0: i32, %arg1: memref<1xi32, #tpu.memory_space<smem>>) -> (i32, i32) {
    %c0_i32 = arith.constant 0 : i32
    %c0_i32_0 = arith.constant 0 : i32
    %c0_i32_1 = arith.constant 0 : i32
    return %c0_i32, %c0_i32_0 : i32, i32
  }
  func.func @transform_5(%arg0: i32, %arg1: memref<1xi32, #tpu.memory_space<smem>>) -> (i32, i32) {
    %c0_i32 = arith.constant 0 : i32
    %c0_i32_0 = arith.constant 0 : i32
    %c0_i32_1 = arith.constant 0 : i32
    return %c0_i32, %c0_i32_0 : i32, i32
  }
  func.func @transform_6(%arg0: i32, %arg1: memref<1xi32, #tpu.memory_space<smem>>) -> (i32, i32) {
    %c0_i32 = arith.constant 0 : i32
    %c0_i32_0 = arith.constant 0 : i32
    %c0_i32_1 = arith.constant 0 : i32
    return %c0_i32, %c0_i32_0 : i32, i32
  }
  func.func @transform_7(%arg0: i32, %arg1: memref<1xi32, #tpu.memory_space<smem>>) -> (i32, i32) {
    %c0_i32 = arith.constant 0 : i32
    %c0_i32_0 = arith.constant 0 : i32
    %c0_i32_1 = arith.constant 0 : i32
    return %c0_i32, %c0_i32_0 : i32, i32
  }
}

</mosaic_0001>

<llo_original>
// kernel: tpu_custom_call.1
$region0: #{tpu_custom_call.1}
  #allocation0 [shape = 'u32[]', space=smem, size = 0x4, offset = 0x4, fixed_abs, tag = 'smem constant byte address 0x4 - core index']
  #allocation1 [shape = 'u32[144,128]{1,0:T(1,128)}', space=vmem, size = 0x12000, scoped, tag = 'internal scratch']
  #allocation2 [shape = 's32[1]{0}', space=sflag, size = 0x4, scoped, tag = 'scoped memory for tpu_custom_call.1']
  #allocation3 [shape = 's32[1]{0:T(128)S(6)}', space=smem, size = 0x200, scoped, tag = 'prefetched SMEM operand 0']
  %s0 = inlined_call_operand.<no memory space> [shape: s32[1], index: 0, kind: input, shape index: {}]
  %s1 = inlined_call_operand.hbm [shape: f32[8,108], index: 1, kind: input, shape index: {}]
  %s2 = inlined_call_operand.hbm [shape: s8[8,128], index: 2, kind: input, shape index: {}]
  %s3 = inlined_call_operand.hbm [shape: f32[108,128], index: 3, kind: input, shape index: {}]
  %s4 = inlined_call_operand.hbm [shape: f32[128,128], index: 4, kind: input, shape index: {}]
  %s5 = inlined_call_operand.vmem [shape: f32[8,128], index: 5, kind: input, shape index: {}]
  %s6 = inlined_call_operand.hbm [shape: f32[8,128], index: 6, kind: input, shape index: {}]
  %s7 = inlined_call_operand.hbm [shape: f32[8,128], index: 7, kind: input, shape index: {}]
  %s8 = inlined_call_operand.hbm [shape: f32[1,128], index: 8, kind: output, shape index: {}]
  %s9 = sld [smem:[#allocation0]]
  $region66: #{tpu_custom_call.1} parent=0
    _
  %s11 = ssub.s32 1, %s9
  %s12 = scalar_select 0, %s11, %s9
  %13 = sst [smem:[#allocation3]] %s0
  $region1: #{tpu_custom_call.1} parent=0
    #allocation4 [shape = 'u8[4096]{0}', space=vmem, size = 0x1000, scoped, tag = 'input window, operand 1, single buffered']
    #allocation5 [shape = 's32[1]{0}', space=sflag, size = 0x4, scoped, tag = 'scoped memory for tpu_custom_call.1']
    #allocation6 [shape = 's32[1]{0}', space=sflag, size = 0x4, scoped, tag = 'scoped memory for tpu_custom_call.1']
    #allocation7 [shape = 'u8[1024]{0}', space=vmem, size = 0x400, scoped, tag = 'input window, operand 2, single buffered']
    #allocation8 [shape = 's32[1]{0}', space=sflag, size = 0x4, scoped, tag = 'scoped memory for tpu_custom_call.1']
    #allocation9 [shape = 'u8[57344]{0}', space=vmem, size = 0xe000, scoped, tag = 'input window, operand 3, single buffered']
    #allocation10 [shape = 'u8[65536]{0}', space=vmem, size = 0x10000, scoped, tag = 'input window, operand 4, single buffered']
    #allocation11 [shape = 's32[1]{0}', space=sflag, size = 0x4, scoped, tag = 'scoped memory for tpu_custom_call.1']
    #allocation12 [shape = 'u8[4096]{0}', space=vmem, size = 0x1000, scoped, tag = 'input window, operand 6, single buffered']
    #allocation13 [shape = 'u8[4096]{0}', space=vmem, size = 0x1000, scoped, tag = 'input window, operand 7, single buffered']
    #allocation14 [shape = 's32[1]{0}', space=sflag, size = 0x4, scoped, tag = 'scoped memory for tpu_custom_call.1']
    #allocation15 [shape = 'u8[512]{0}', space=vmem, size = 0x400, scoped, tag = 'output window, operand 0, single buffered']
    %14 = vsyncpa [#allocation5], 0
    %15 = vsyncpa [#allocation8], 0
    %16 = vsyncpa [#allocation11], 0
    %17 = vsyncpa [#allocation14], 0
    %18 = vsyncpa [#allocation6], 0
    // Predicated region
    $region2: #{tpu_custom_call.1} parent=1 // pred_check
      _
    $region3: #{tpu_custom_call.1} parent=1 // pred_check_branch
      %20 = sbr.rel (0) target = $region5
    $region4: #{tpu_custom_call.1} parent=1 // pred_region
      %s22 = ssub.s32 128, 128
      %23 = vsyncadd [#allocation5], %s22
      %s25 = sshll.u32 [#allocation4], 4
      %s26 = int_to_ptr.vmem [resolvable:$true] %s25
      %28 = dma.hbm_to_vmem [thread:$0]  %s1, 128, %s26, [#allocation5]
    $region5: #{tpu_custom_call.1} parent=1 // pred_fallthru
      _
    // Predicated region
    $region6: #{tpu_custom_call.1} parent=1 // pred_check
      _
    $region7: #{tpu_custom_call.1} parent=1 // pred_check_branch
      %30 = sbr.rel (0) target = $region9
    $region8: #{tpu_custom_call.1} parent=1 // pred_region
      %s32 = ssub.s32 32, 32
      %33 = vsyncadd [#allocation8], %s32
      %s35 = sshll.u32 [#allocation7], 4
      %s36 = int_to_ptr.vmem [resolvable:$true] %s35
      %38 = dma.hbm_to_vmem [thread:$0]  %s2, 32, %s36, [#allocation8]
    $region9: #{tpu_custom_call.1} parent=1 // pred_fallthru
      _
    // Predicated region
    $region10: #{tpu_custom_call.1} parent=1 // pred_check
      _
    $region11: #{tpu_custom_call.1} parent=1 // pred_check_branch
      %40 = sbr.rel (0) target = $region13
    $region12: #{tpu_custom_call.1} parent=1 // pred_region
      %s42 = ssub.s32 1792, 1792
      %43 = vsyncadd [#allocation8], %s42
      %s44 = sshll.u32 [#allocation9], 4
      %s45 = int_to_ptr.vmem [resolvable:$true] %s44
      %50 = dma.hbm_to_vmem [thread:$0]  %s3, 1792, %s45, [#allocation8], 128, 128, 8
    $region13: #{tpu_custom_call.1} parent=1 // pred_fallthru
      _
    // Predicated region
    $region14: #{tpu_custom_call.1} parent=1 // pred_check
      _
    $region15: #{tpu_custom_call.1} parent=1 // pred_check_branch
      %52 = sbr.rel (0) target = $region17
    $region16: #{tpu_custom_call.1} parent=1 // pred_region
      %s54 = ssub.s32 2048, 2048
      %55 = vsyncadd [#allocation11], %s54
      %s56 = sshll.u32 [#allocation10], 4
      %s57 = int_to_ptr.vmem [resolvable:$true] %s56
      %62 = dma.hbm_to_vmem [thread:$0]  %s4, 2048, %s57, [#allocation11], 128, 128, 8
    $region17: #{tpu_custom_call.1} parent=1 // pred_fallthru
      _
    // Predicated region
    $region18: #{tpu_custom_call.1} parent=1 // pred_check
      _
    $region19: #{tpu_custom_call.1} parent=1 // pred_check_branch
      %64 = sbr.rel (0) target = $region21
    $region20: #{tpu_custom_call.1} parent=1 // pred_region
      _
    $region21: #{tpu_custom_call.1} parent=1 // pred_fallthru
      _
    // Predicated region
    $region22: #{tpu_custom_call.1} parent=1 // pred_check
      _
    $region23: #{tpu_custom_call.1} parent=1 // pred_check_branch
      %66 = sbr.rel (0) target = $region25
    $region24: #{tpu_custom_call.1} parent=1 // pred_region
      %s68 = ssub.s32 128, 128
      %69 = vsyncadd [#allocation11], %s68
      %s71 = sshll.u32 [#allocation12], 4
      %s72 = int_to_ptr.vmem [resolvable:$true] %s71
      %74 = dma.hbm_to_vmem [thread:$0]  %s6, 128, %s72, [#allocation11]
    $region25: #{tpu_custom_call.1} parent=1 // pred_fallthru
      _
    // Predicated region
    $region26: #{tpu_custom_call.1} parent=1 // pred_check
      _
    $region27: #{tpu_custom_call.1} parent=1 // pred_check_branch
      %76 = sbr.rel (0) target = $region29
    $region28: #{tpu_custom_call.1} parent=1 // pred_region
      %s78 = ssub.s32 128, 128
      %79 = vsyncadd [#allocation14], %s78
      %s81 = sshll.u32 [#allocation13], 4
      %s82 = int_to_ptr.vmem [resolvable:$true] %s81
      %84 = dma.hbm_to_vmem [thread:$0]  %s7, 128, %s82, [#allocation14]
    $region29: #{tpu_custom_call.1} parent=1 // pred_fallthru
      _
    // Predicated region
    $region30: #{tpu_custom_call.1} parent=1 // pred_check
      _
    $region31: #{tpu_custom_call.1} parent=1 // pred_check_branch
      %86 = sbr.rel (0) target = $region33
    $region32: #{tpu_custom_call.1} parent=1 // pred_region
      %87 = dma.done [#allocation5], 128
    $region33: #{tpu_custom_call.1} parent=1 // pred_fallthru
      _
    // Predicated region
    $region34: #{tpu_custom_call.1} parent=1 // pred_check
      _
    $region35: #{tpu_custom_call.1} parent=1 // pred_check_branch
      %89 = sbr.rel (0) target = $region37
    $region36: #{tpu_custom_call.1} parent=1 // pred_region
      %90 = dma.done [#allocation8], 32
    $region37: #{tpu_custom_call.1} parent=1 // pred_fallthru
      _
    // Predicated region
    $region38: #{tpu_custom_call.1} parent=1 // pred_check
      _
    $region39: #{tpu_custom_call.1} parent=1 // pred_check_branch
      %92 = sbr.rel (0) target = $region41
    $region40: #{tpu_custom_call.1} parent=1 // pred_region
      %93 = dma.done [#allocation8], 1792
    $region41: #{tpu_custom_call.1} parent=1 // pred_fallthru
      _
    // Predicated region
    $region42: #{tpu_custom_call.1} parent=1 // pred_check
      _
    $region43: #{tpu_custom_call.1} parent=1 // pred_check_branch
      %95 = sbr.rel (0) target = $region45
    $region44: #{tpu_custom_call.1} parent=1 // pred_region
      %96 = dma.done [#allocation11], 2048
    $region45: #{tpu_custom_call.1} parent=1 // pred_fallthru
      _
    // Predicated region
    $region46: #{tpu_custom_call.1} parent=1 // pred_check
      _
    $region47: #{tpu_custom_call.1} parent=1 // pred_check_branch
      %98 = sbr.rel (0) target = $region49
    $region48: #{tpu_custom_call.1} parent=1 // pred_region
      %99 = dma.done [#allocation11], 128
    $region49: #{tpu_custom_call.1} parent=1 // pred_fallthru
      _
    // Predicated region
    $region50: #{tpu_custom_call.1} parent=1 // pred_check
      _
    $region51: #{tpu_custom_call.1} parent=1 // pred_check_branch
      %101 = sbr.rel (0) target = $region53
    $region52: #{tpu_custom_call.1} parent=1 // pred_region
      %102 = dma.done [#allocation14], 128
    $region53: #{tpu_custom_call.1} parent=1 // pred_fallthru
      _
    %p103 = scmp.eq.s32.totalorder 0, 0
    // Predicated region
    $region54: #{tpu_custom_call.1} parent=1 // pred_check
      %p104 = pneg %p103
    $region55: #{tpu_custom_call.1} parent=1 // pred_check_branch
      %106 = sbr.rel (%p104) target = $region57
    $region56: #{tpu_custom_call.1} parent=1 // pred_region
      %107 = vst [vmem:[#allocation15] sm:$0x1] 0.0
    $region57: #{tpu_custom_call.1} parent=1 // pred_fallthru
      _
    %v108 = vld [vmem:[#allocation4] sm:$0xff]
    %v109 = vld [vmem:[#allocation9] sm:$0xff]
    %v110 = vld [vmem:[#allocation9 + $0x8] sm:$0xff]
    %v111 = vld [vmem:[#allocation9 + $0x10] sm:$0xff]
    %v112 = vld [vmem:[#allocation9 + $0x18] sm:$0xff]
    %v113 = vld [vmem:[#allocation9 + $0x20] sm:$0xff]
    %v114 = vld [vmem:[#allocation9 + $0x28] sm:$0xff]
    %v115 = vld [vmem:[#allocation9 + $0x30] sm:$0xff]
    %v116 = vld [vmem:[#allocation9 + $0x38] sm:$0xff]
    %v117 = vld [vmem:[#allocation9 + $0x40] sm:$0xff]
    %v118 = vld [vmem:[#allocation9 + $0x48] sm:$0xff]
    %v119 = vld [vmem:[#allocation9 + $0x50] sm:$0xff]
    %v120 = vld [vmem:[#allocation9 + $0x58] sm:$0xff]
    %v121 = vld [vmem:[#allocation9 + $0x60] sm:$0xff]
    %v122 = vld [vmem:[#allocation9 + $0x68] sm:$0xf]
    %vm123 = vcmask 883712
    %v125 = vsel %vm123, %v108, 0
    %vm127 = vcmask 1043456
    %v129 = vsel %vm127, %v122, 0
    %131 = vmatprep.subr.mxu0 0.0
    %132 = vmatpush1.msra.mxu0 0.0
    %133 = vmatprep.subr.mxu0 0.0
    %134 = vmatpush1.msra.mxu0 0.0
    %135 = vmatprep.subr.mxu0 0.0
    %136 = vmatpush1.msra.mxu0 %v129
    %137 = vmatprep.subr.mxu0 0.0
    %138 = vmatpush1.msra.mxu0 %v121
    %139 = vmatprep.subr.mxu0 0.0
    %140 = vmatpush1.msra.mxu0 %v120
    %141 = vmatprep.subr.mxu0 0.0
    %142 = vmatpush1.msra.mxu0 %v119
    %143 = vmatprep.subr.mxu0 0.0
    %144 = vmatpush1.msra.mxu0 %v118
    %145 = vmatprep.subr.mxu0 0.0
    %146 = vmatpush1.msra.mxu0 %v117
    %147 = vmatprep.subr.mxu0 0.0
    %148 = vmatpush1.msra.mxu0 %v116
    %149 = vmatprep.subr.mxu0 0.0
    %150 = vmatpush1.msra.mxu0 %v115
    %151 = vmatprep.subr.mxu0 0.0
    %152 = vmatpush1.msra.mxu0 %v114
    %153 = vmatprep.subr.mxu0 0.0
    %154 = vmatpush1.msra.mxu0 %v113
    %155 = vmatprep.subr.mxu0 0.0
    %156 = vmatpush1.msra.mxu0 %v112
    %157 = vmatprep.subr.mxu0 0.0
    %158 = vmatpush1.msra.mxu0 %v111
    %159 = vmatprep.subr.mxu0 0.0
    %160 = vmatpush1.msra.mxu0 %v110
    %161 = vmatprep.subr.mxu0 0.0
    %162 = vmatpush1.msra.mxu0 %v109
    %163 = vmatprep.subr.mxu0 0.0
    %164 = vmatpush2.msra.mxu0 0.0
    %165 = vmatprep.subr.mxu0 0.0
    %166 = vmatpush2.msra.mxu0 0.0
    %167 = vmatprep.subr.mxu0 0.0
    %168 = vmatpush2.msra.mxu0 0.0
    %169 = vmatprep.subr.mxu0 0.0
    %170 = vmatpush2.msra.mxu0 0.0
    %171 = vmatprep.subr.mxu0 0.0
    %172 = vmatpush2.msra.mxu0 0.0
    %173 = vmatprep.subr.mxu0 0.0
    %174 = vmatpush2.msra.mxu0 0.0
    %175 = vmatprep.subr.mxu0 0.0
    %176 = vmatpush2.msra.mxu0 0.0
    %177 = vmatprep.subr.mxu0 0.0
    %178 = vmatpush2.msra.mxu0 0.0
    %179 = vmatprep.subr.mxu0 0.0
    %180 = vmatpush2.msra.mxu0 0.0
    %181 = vmatprep.subr.mxu0 0.0
    %182 = vmatpush2.msra.mxu0 0.0
    %183 = vmatprep.subr.mxu0 0.0
    %184 = vmatpush2.msra.mxu0 0.0
    %185 = vmatprep.subr.mxu0 0.0
    %186 = vmatpush2.msra.mxu0 0.0
    %187 = vmatprep.subr.mxu0 0.0
    %188 = vmatpush2.msra.mxu0 0.0
    %189 = vmatprep.subr.mxu0 0.0
    %190 = vmatpush2.msra.mxu0 0.0
    %191 = vmatprep.subr.mxu0 0.0
    %192 = vmatpush2.msra.mxu0 0.0
    %193 = vmatprep.subr.mxu0 0.0
    %194 = vmatpush2.msra.mxu0 0.0
    %195 = vmatprep.mubr.f32.mxu0 0.0
    %196 = vmatmul.mubr.f32.gmra.mxu0 %v125
    %v197 = vpop.f32.mrf.mxu0
    %v198 = vadd.f32 0.0, %v197
    %v199 = vpop.f32.mrf.mxu0
    %200 = vdwg.mxu0
    %v201 = vld [vmem:[%s5] sm:$0xff]
    %v202 = vld [vmem:[#allocation12] sm:$0xff]
    %v203 = vld [vmem:[#allocation13] sm:$0xff]
    %v204 = vlaneseq
    %v205 = vshrl.u32 %v204, 7
    %v206 = vsub.s32 0, %v205
    %v207 = vrot.slane %v201, %v206
    %v208 = vadd.f32 %v198, %v207
    %209 = vmax.xlane.f32.xlu0 %v208
    %v210 = vpop.xlane.xlu0 %209
    %v211 = vlaneseq
    %v212 = vshrl.u32 %v211, 7
    %v213 = vsub.s32 0, %v212
    %v214 = vrot.slane %v203, %v213
    %v215 = vmul.f32 %v210, %v214
    %v216 = vadd.f32 %v215, 0.0
    %v217 = vlaneseq
    %v218 = vshrl.u32 %v217, 7
    %v219 = vsub.s32 0, %v218
    %v220 = vrot.slane %v202, %v219
    %v221 = vmul.f32 %v210, %v220
    %v222 = vadd.f32 %v221, 0.0
    %v223 = vlaneseq
    %v224 = vshrl.u32 %v223, 7
    %v225 = vsub.s32 1, %v224
    %v226 = vrot.slane %v201, %v225
    %v227 = vadd.f32 %v198, %v226
    %228 = vmax.xlane.f32.xlu0 %v227
    %v229 = vpop.xlane.xlu0 %228
    %v230 = vlaneseq
    %v231 = vshrl.u32 %v230, 7
    %v232 = vsub.s32 1, %v231
    %v233 = vrot.slane %v203, %v232
    %v234 = vmul.f32 %v229, %v233
    %v235 = vadd.f32 %v216, %v234
    %v236 = vlaneseq
    %v237 = vshrl.u32 %v236, 7
    %v238 = vsub.s32 1, %v237
    %v239 = vrot.slane %v202, %v238
    %v240 = vmul.f32 %v229, %v239
    %v241 = vadd.f32 %v222, %v240
    %v242 = vlaneseq
    %v243 = vshrl.u32 %v242, 7
    %v244 = vsub.s32 2, %v243
    %v245 = vrot.slane %v201, %v244
    %v246 = vadd.f32 %v198, %v245
    %247 = vmax.xlane.f32.xlu0 %v246
    %v248 = vpop.xlane.xlu0 %247
    %v249 = vlaneseq
    %v250 = vshrl.u32 %v249, 7
    %v251 = vsub.s32 2, %v250
    %v252 = vrot.slane %v203, %v251
    %v253 = vmul.f32 %v248, %v252
    %v254 = vadd.f32 %v235, %v253
    %v255 = vlaneseq
    %v256 = vshrl.u32 %v255, 7
    %v257 = vsub.s32 2, %v256
    %v258 = vrot.slane %v202, %v257
    %v259 = vmul.f32 %v248, %v258
    %v260 = vadd.f32 %v241, %v259
    %v261 = vlaneseq
    %v262 = vshrl.u32 %v261, 7
    %v263 = vsub.s32 3, %v262
    %v264 = vrot.slane %v201, %v263
    %v265 = vadd.f32 %v198, %v264
    %266 = vmax.xlane.f32.xlu0 %v265
    %v267 = vpop.xlane.xlu0 %266
    %v268 = vlaneseq
    %v269 = vshrl.u32 %v268, 7
    %v270 = vsub.s32 3, %v269
    %v271 = vrot.slane %v203, %v270
    %v272 = vmul.f32 %v267, %v271
    %v273 = vadd.f32 %v254, %v272
    %v274 = vlaneseq
    %v275 = vshrl.u32 %v274, 7
    %v276 = vsub.s32 3, %v275
    %v277 = vrot.slane %v202, %v276
    %v278 = vmul.f32 %v267, %v277
    %v279 = vadd.f32 %v260, %v278
    %v280 = vlaneseq
    %v281 = vshrl.u32 %v280, 7
    %v282 = vsub.s32 4, %v281
    %v283 = vrot.slane %v201, %v282
    %v284 = vadd.f32 %v198, %v283
    %285 = vmax.xlane.f32.xlu0 %v284
    %v286 = vpop.xlane.xlu0 %285
    %v287 = vlaneseq
    %v288 = vshrl.u32 %v287, 7
    %v289 = vsub.s32 4, %v288
    %v290 = vrot.slane %v203, %v289
    %v291 = vmul.f32 %v286, %v290
    %v292 = vadd.f32 %v273, %v291
    %v293 = vlaneseq
    %v294 = vshrl.u32 %v293, 7
    %v295 = vsub.s32 4, %v294
    %v296 = vrot.slane %v202, %v295
    %v297 = vmul.f32 %v286, %v296
    %v298 = vadd.f32 %v279, %v297
    %v299 = vsub.f32 %v198, %v298
    %v300 = vlaneseq
    %v301 = vshrl.u32 %v300, 7
    %v302 = vsub.s32 5, %v301
    %v303 = vrot.slane %v203, %v302
    %v304 = vadd.f32 %v299, %v303
    %v305 = vmul.f32 %v304, 1.442695
    %v306 = vpow.pop %v305
    %v307 = vld [vmem:[#allocation10] sm:$0xff]
    %v308 = vld [vmem:[#allocation10 + $0x8] sm:$0xff]
    %v309 = vld [vmem:[#allocation10 + $0x10] sm:$0xff]
    %v310 = vld [vmem:[#allocation10 + $0x18] sm:$0xff]
    %v311 = vld [vmem:[#allocation10 + $0x20] sm:$0xff]
    %v312 = vld [vmem:[#allocation10 + $0x28] sm:$0xff]
    %v313 = vld [vmem:[#allocation10 + $0x30] sm:$0xff]
    %v314 = vld [vmem:[#allocation10 + $0x38] sm:$0xff]
    %v315 = vld [vmem:[#allocation10 + $0x40] sm:$0xff]
    %v316 = vld [vmem:[#allocation10 + $0x48] sm:$0xff]
    %v317 = vld [vmem:[#allocation10 + $0x50] sm:$0xff]
    %v318 = vld [vmem:[#allocation10 + $0x58] sm:$0xff]
    %v319 = vld [vmem:[#allocation10 + $0x60] sm:$0xff]
    %v320 = vld [vmem:[#allocation10 + $0x68] sm:$0xff]
    %v321 = vld [vmem:[#allocation10 + $0x70] sm:$0xff]
    %v322 = vld [vmem:[#allocation10 + $0x78] sm:$0xff]
    %v323 = vld [vmem:[#allocation7] sm:$0x3]
    %v324 = vunpack.c.0.s8 %v323
    %v325 = vcvt.s32.f32 %v324
    %v326 = vmul.f32 %v325, %v198
    %327 = vmatprep.subr.mxu0 0.0
    %328 = vmatpush1.msra.mxu0 %v322
    %329 = vmatprep.subr.mxu0 0.0
    %330 = vmatpush1.msra.mxu0 %v321
    %331 = vmatprep.subr.mxu0 0.0
    %332 = vmatpush1.msra.mxu0 %v320
    %333 = vmatprep.subr.mxu0 0.0
    %334 = vmatpush1.msra.mxu0 %v319
    %335 = vmatprep.subr.mxu0 0.0
    %336 = vmatpush1.msra.mxu0 %v318
    %337 = vmatprep.subr.mxu0 0.0
    %338 = vmatpush1.msra.mxu0 %v317
    %339 = vmatprep.subr.mxu0 0.0
    %340 = vmatpush1.msra.mxu0 %v316
    %341 = vmatprep.subr.mxu0 0.0
    %342 = vmatpush1.msra.mxu0 %v315
    %343 = vmatprep.subr.mxu0 0.0
    %344 = vmatpush1.msra.mxu0 %v314
    %345 = vmatprep.subr.mxu0 0.0
    %346 = vmatpush1.msra.mxu0 %v313
    %347 = vmatprep.subr.mxu0 0.0
    %348 = vmatpush1.msra.mxu0 %v312
    %349 = vmatprep.subr.mxu0 0.0
    %350 = vmatpush1.msra.mxu0 %v311
    %351 = vmatprep.subr.mxu0 0.0
    %352 = vmatpush1.msra.mxu0 %v310
    %353 = vmatprep.subr.mxu0 0.0
    %354 = vmatpush1.msra.mxu0 %v309
    %355 = vmatprep.subr.mxu0 0.0
    %356 = vmatpush1.msra.mxu0 %v308
    %357 = vmatprep.subr.mxu0 0.0
    %358 = vmatpush1.msra.mxu0 %v307
    %359 = vmatprep.subr.mxu0 0.0
    %360 = vmatpush2.msra.mxu0 0.0
    %361 = vmatprep.subr.mxu0 0.0
    %362 = vmatpush2.msra.mxu0 0.0
    %363 = vmatprep.subr.mxu0 0.0
    %364 = vmatpush2.msra.mxu0 0.0
    %365 = vmatprep.subr.mxu0 0.0
    %366 = vmatpush2.msra.mxu0 0.0
    %367 = vmatprep.subr.mxu0 0.0
    %368 = vmatpush2.msra.mxu0 0.0
    %369 = vmatprep.subr.mxu0 0.0
    %370 = vmatpush2.msra.mxu0 0.0
    %371 = vmatprep.subr.mxu0 0.0
    %372 = vmatpush2.msra.mxu0 0.0
    %373 = vmatprep.subr.mxu0 0.0
    %374 = vmatpush2.msra.mxu0 0.0
    %375 = vmatprep.subr.mxu0 0.0
    %376 = vmatpush2.msra.mxu0 0.0
    %377 = vmatprep.subr.mxu0 0.0
    %378 = vmatpush2.msra.mxu0 0.0
    %379 = vmatprep.subr.mxu0 0.0
    %380 = vmatpush2.msra.mxu0 0.0
    %381 = vmatprep.subr.mxu0 0.0
    %382 = vmatpush2.msra.mxu0 0.0
    %383 = vmatprep.subr.mxu0 0.0
    %384 = vmatpush2.msra.mxu0 0.0
    %385 = vmatprep.subr.mxu0 0.0
    %386 = vmatpush2.msra.mxu0 0.0
    %387 = vmatprep.subr.mxu0 0.0
    %388 = vmatpush2.msra.mxu0 0.0
    %389 = vmatprep.subr.mxu0 0.0
    %390 = vmatpush2.msra.mxu0 0.0
    %391 = vmatprep.mubr.f32.mxu0 0.0
    %392 = vmatmul.mubr.f32.gmra.mxu0 %v326
    %v393 = vpop.f32.mrf.mxu0
    %v394 = vadd.f32 0.0, %v393
    %v395 = vpop.f32.mrf.mxu0
    %396 = vdwg.mxu0
    %v397 = vlaneseq
    %v398 = vshrl.u32 %v397, 7
    %v399 = vsub.s32 6, %v398
    %v400 = vrot.slane %v203, %v399
    %401 = vmatprep.subr.mxu0 0.0
    %402 = vmatpush1.msra.mxu0 %v322
    %403 = vmatprep.subr.mxu0 0.0
    %404 = vmatpush1.msra.mxu0 %v321
    %405 = vmatprep.subr.mxu0 0.0
    %406 = vmatpush1.msra.mxu0 %v320
    %407 = vmatprep.subr.mxu0 0.0
    %408 = vmatpush1.msra.mxu0 %v319
    %409 = vmatprep.subr.mxu0 0.0
    %410 = vmatpush1.msra.mxu0 %v318
    %411 = vmatprep.subr.mxu0 0.0
    %412 = vmatpush1.msra.mxu0 %v317
    %413 = vmatprep.subr.mxu0 0.0
    %414 = vmatpush1.msra.mxu0 %v316
    %415 = vmatprep.subr.mxu0 0.0
    %416 = vmatpush1.msra.mxu0 %v315
    %417 = vmatprep.subr.mxu0 0.0
    %418 = vmatpush1.msra.mxu0 %v314
    %419 = vmatprep.subr.mxu0 0.0
    %420 = vmatpush1.msra.mxu0 %v313
    %421 = vmatprep.subr.mxu0 0.0
    %422 = vmatpush1.msra.mxu0 %v312
    %423 = vmatprep.subr.mxu0 0.0
    %424 = vmatpush1.msra.mxu0 %v311
    %425 = vmatprep.subr.mxu0 0.0
    %426 = vmatpush1.msra.mxu0 %v310
    %427 = vmatprep.subr.mxu0 0.0
    %428 = vmatpush1.msra.mxu0 %v309
    %429 = vmatprep.subr.mxu0 0.0
    %430 = vmatpush1.msra.mxu0 %v308
    %431 = vmatprep.subr.mxu0 0.0
    %432 = vmatpush1.msra.mxu0 %v307
    %433 = vmatprep.subr.mxu0 0.0
    %434 = vmatpush2.msra.mxu0 0.0
    %435 = vmatprep.subr.mxu0 0.0
    %436 = vmatpush2.msra.mxu0 0.0
    %437 = vmatprep.subr.mxu0 0.0
    %438 = vmatpush2.msra.mxu0 0.0
    %439 = vmatprep.subr.mxu0 0.0
    %440 = vmatpush2.msra.mxu0 0.0
    %441 = vmatprep.subr.mxu0 0.0
    %442 = vmatpush2.msra.mxu0 0.0
    %443 = vmatprep.subr.mxu0 0.0
    %444 = vmatpush2.msra.mxu0 0.0
    %445 = vmatprep.subr.mxu0 0.0
    %446 = vmatpush2.msra.mxu0 0.0
    %447 = vmatprep.subr.mxu0 0.0
    %448 = vmatpush2.msra.mxu0 0.0
    %449 = vmatprep.subr.mxu0 0.0
    %450 = vmatpush2.msra.mxu0 0.0
    %451 = vmatprep.subr.mxu0 0.0
    %452 = vmatpush2.msra.mxu0 0.0
    %453 = vmatprep.subr.mxu0 0.0
    %454 = vmatpush2.msra.mxu0 0.0
    %455 = vmatprep.subr.mxu0 0.0
    %456 = vmatpush2.msra.mxu0 0.0
    %457 = vmatprep.subr.mxu0 0.0
    %458 = vmatpush2.msra.mxu0 0.0
    %459 = vmatprep.subr.mxu0 0.0
    %460 = vmatpush2.msra.mxu0 0.0
    %461 = vmatprep.subr.mxu0 0.0
    %462 = vmatpush2.msra.mxu0 0.0
    %463 = vmatprep.subr.mxu0 0.0
    %464 = vmatpush2.msra.mxu0 0.0
    %465 = vmatprep.mubr.f32.mxu0 0.0
    %466 = vmatmul.mubr.f32.gmra.mxu0 %v306
    %v467 = vpop.f32.mrf.mxu0
    %v468 = vadd.f32 %v400, %v467
    %v469 = vpop.f32.mrf.mxu0
    %470 = vdwg.mxu0
    %v471 = vlog2.pop %v468
    %v472 = vmul.f32 %v471, 0.6931472
    %v473 = vadd.f32 %v292, %v472
    %v474 = vsub.f32 %v473, %v394
    %v475 = vsub.f32 0.0, %v474
    %v476 = vmul.f32 %v475, 1.442695
    %v477 = vpow.pop %v476
    %v478 = vsub.f32 1.0, %v477
    %v479 = vmul.f32 %v478, %v478
    %v480 = vmul.f32 %v479, %v474
    %v481 = vlaneseq
    %v482 = vshrl.u32 %v481, 7
    %s483 = smul.u32 0, 8
    %v484 = vstv %s483
    %v485 = vadd.s32 %v482, %v484
    %s486 = sld [smem:[#allocation3]]
    %v487 = vstv %s486
    %vm488 = vcmp.lt.s32.totalorder %v485, %v487
    %v489 = vsel %vm488, 1, 0
    %v490 = vcvt.s32.f32 %v489
    %v491 = vld [vmem:[#allocation15] sm:$0x1]
    %v492 = vmul.f32 %v480, %v490
    %v493 = vrot.slane %v492, 4
    %v494 = vadd.f32 %v492, %v493
    %v495 = vrot.slane %v494, 2
    %v496 = vadd.f32 %v494, %v495
    %v497 = vrot.slane %v496, 1
    %v498 = vadd.f32 %v496, %v497
    %v499 = vadd.f32 %v491, %v498
    %500 = vst [vmem:[#allocation15] sm:$0x1] %v499
    // Predicated region
    $region58: #{tpu_custom_call.1} parent=1 // pred_check
      _
    $region59: #{tpu_custom_call.1} parent=1 // pred_check_branch
      %502 = sbr.rel (0) target = $region61
    $region60: #{tpu_custom_call.1} parent=1 // pred_region
      %s504 = ssub.s32 16, 16
      %505 = vsyncadd [#allocation6], %s504
      %s507 = sshll.u32 [#allocation15], 4
      %s508 = int_to_ptr.vmem [resolvable:$true] %s507
      %510 = dma.vmem_to_hbm [thread:$0]  %s508, 16, %s8, [#allocation6]
    $region61: #{tpu_custom_call.1} parent=1 // pred_fallthru
      _
    // Predicated region
    $region62: #{tpu_custom_call.1} parent=1 // pred_check
      _
    $region63: #{tpu_custom_call.1} parent=1 // pred_check_branch
      %512 = sbr.rel (0) target = $region65
    $region64: #{tpu_custom_call.1} parent=1 // pred_region
      %513 = dma.done [#allocation6], 16
    $region65: #{tpu_custom_call.1} parent=1 // pred_fallthru
      _
    %514 = vsyncpa [#allocation5], 1
    %515 = vsyncpa [#allocation8], 1
    %516 = vsyncpa [#allocation11], 1
    %517 = vsyncpa [#allocation14], 1
    %518 = vsyncpa [#allocation6], 1

</llo_original>
